<compile_context>
chip_gen: v7x
topology: tpu7x:2x2x1
jax: 0.10.0
libtpu: 0.0.40
codegen_flags: <defaults>
</compile_context>

<pallas_src>
import functools

import jax
import jax.numpy as jnp
from jax.experimental import pallas as pl
from jax.experimental.pallas import tpu as pltpu

_EPS = 1e-8

_TM = 256       # pairwise tile rows (x)
_TN = 256       # pairwise tile cols (y rows)
_TN_ROW = 512   # row-wise tile rows


def _pick_tile(dim, pref):
    # Full dim if it fits in one block (always layout-legal: block == array dim),
    # otherwise the preferred tile (a multiple of 8 and 128).
    return dim if dim <= pref else pref


# ---------------------------------------------------------------------------
# Kernel 1: pairwise cosine-similarity matrix  (B, H) x (C, H) -> (B, C)
# One MXU matmul per (i, j) tile + a short VPU epilogue.
# ---------------------------------------------------------------------------
def _pairwise_cos_kernel(x_ref, y_ref, nx_ref, ny_ref, o_ref, *, temp):
    # Contract the last (lane) dim of both operands: MXU-native, no explicit
    # y.T relayout. Operands stay in their input dtype (bf16 goes straight to
    # the MXU); accumulation is f32 via preferred_element_type.
    dots = jax.lax.dot_general(
        x_ref[...], y_ref[...],
        dimension_numbers=(((1,), (1,)), ((), ())),
        preferred_element_type=jnp.float32)                      # (tm, tn) f32
    # PyTorch semantics: dot / max(||x||*||y||, eps), with 1/temp folded into
    # the same per-element scale -> a single divide in the epilogue.
    denom = jnp.maximum(nx_ref[...] * ny_ref[...], _EPS) * temp  # (tm, tn)
    o_ref[...] = (dots / denom).astype(o_ref.dtype)


def _pairwise_cos_sim(x2d, y2d, temp, *, tm=None, tn=None):
    B, H = x2d.shape
    C, H2 = y2d.shape
    assert H == H2
    tm = _pick_tile(B, _TM) if tm is None else tm
    tn = _pick_tile(C, _TN) if tn is None else tn

    # Row norms precomputed once (tiny, fused by XLA) so the tiled kernel does
    # not redo the y-norm for every i block (and vice versa).
    xf = x2d.astype(jnp.float32)
    yf = y2d.astype(jnp.float32)
    nx = jnp.sqrt(jnp.sum(xf * xf, axis=-1, keepdims=True))   # (B, 1) f32
    ny = jnp.sqrt(jnp.sum(yf * yf, axis=-1))[None, :]          # (1, C) f32

    kernel = functools.partial(_pairwise_cos_kernel, temp=temp)
    grid = (pl.cdiv(B, tm), pl.cdiv(C, tn))
    return pl.pallas_call(
        kernel,
        out_shape=jax.ShapeDtypeStruct((B, C), x2d.dtype),
        grid_spec=pltpu.PrefetchScalarGridSpec(
            num_scalar_prefetch=0,
            grid=grid,
            in_specs=[
                pl.BlockSpec((tm, H), lambda i, j: (i, 0)),
                pl.BlockSpec((tn, H), lambda i, j: (j, 0)),
                pl.BlockSpec((tm, 1), lambda i, j: (i, 0)),
                pl.BlockSpec((1, tn), lambda i, j: (0, j)),
            ],
            out_specs=pl.BlockSpec((tm, tn), lambda i, j: (i, j)),
        ),
        compiler_params=pltpu.CompilerParams(
            dimension_semantics=("parallel", "parallel")),
    )(x2d, y2d, nx, ny)


# ---------------------------------------------------------------------------
# Kernel 2: row-wise cosine similarity  (N, H) x (N, H) -> (N,)
# Per-row reductions are done with a ones-vector matmul so results land
# lane-major as a (1, tn) row -> lane-dense output stores.
# ---------------------------------------------------------------------------
def _rowwise_cos_kernel(x_ref, y_ref, o_ref, *, temp):
    x = x_ref[...].astype(jnp.float32)            # (tn, H)
    y = y_ref[...].astype(jnp.float32)
    ones = jnp.ones((1, x.shape[-1]), jnp.float32)
    dn = (((1,), (1,)), ((), ()))                  # contract H of both operands
    dots = jax.lax.dot_general(ones, x * y, dn,
                               preferred_element_type=jnp.float32)   # (1, tn)
    nx2 = jax.lax.dot_general(ones, x * x, dn,
                              preferred_element_type=jnp.float32)    # (1, tn)
    ny2 = jax.lax.dot_general(ones, y * y, dn,
                              preferred_element_type=jnp.float32)    # (1, tn)
    denom = jnp.maximum(jnp.sqrt(nx2 * ny2), _EPS) * temp
    o_ref[...] = (dots / denom).astype(o_ref.dtype)


def _rowwise_cos_sim(x2d, y2d, temp, *, tn=None):
    N, H = x2d.shape
    tn = _pick_tile(N, _TN_ROW) if tn is None else tn
    kernel = functools.partial(_rowwise_cos_kernel, temp=temp)
    out = pl.pallas_call(
        kernel,
        out_shape=jax.ShapeDtypeStruct((1, N), x2d.dtype),
        grid_spec=pltpu.PrefetchScalarGridSpec(
            num_scalar_prefetch=0,
            grid=(pl.cdiv(N, tn),),
            in_specs=[
                pl.BlockSpec((tn, H), lambda i: (i, 0)),
                pl.BlockSpec((tn, H), lambda i: (i, 0)),
            ],
            out_specs=pl.BlockSpec((1, tn), lambda i: (0, i)),
        ),
        compiler_params=pltpu.CompilerParams(
            dimension_semantics=("parallel",)),
    )(x2d, y2d)
    return out[0]


class Similarity:
    """JAX/Pallas port of scd.models.Similarity (cosine sim / temp)."""

    def __init__(self, temp):
        self.temp = float(temp)

    def __call__(self, x, y):
        x = jnp.asarray(x)
        y = jnp.asarray(y)
        # Pairwise broadcast cases (SimCSE usage): (B,1,H) x (1,C,H) -> (B,C)
        if x.ndim == 3 and y.ndim == 3 and x.shape[-1] == y.shape[-1]:
            if x.shape[1] == 1 and y.shape[0] == 1:
                return _pairwise_cos_sim(x[:, 0, :], y[0, :, :], self.temp)
            if x.shape[0] == 1 and y.shape[1] == 1:
                # cosine is symmetric: result[b, c] = cos(y[b,0], x[0,c]) / temp
                return _pairwise_cos_sim(y[:, 0, :], x[0, :, :], self.temp)
        # Same-shape case: cosine along last dim -> shape x.shape[:-1]
        if x.shape == y.shape:
            lead = x.shape[:-1]
            H = x.shape[-1]
            return _rowwise_cos_sim(x.reshape(-1, H), y.reshape(-1, H),
                                    self.temp).reshape(lead)
        # TODO(synk): general NumPy-style broadcasting beyond the cases above
        # materializes the broadcast operands in HBM and uses the row-wise
        # kernel; separable outer-product patterns could be routed to the
        # pairwise kernel instead.
        bshape = jnp.broadcast_shapes(x.shape, y.shape)
        xb = jnp.broadcast_to(x, bshape).reshape(-1, bshape[-1])
        yb = jnp.broadcast_to(y, bshape).reshape(-1, bshape[-1])
        return _rowwise_cos_sim(xb, yb, self.temp).reshape(bshape[:-1])


def _reference(x, y, temp):
    x = x.astype(jnp.float32)
    y = y.astype(jnp.float32)
    dots = jnp.sum(x * y, axis=-1)
    nx = jnp.sqrt(jnp.sum(x * x, axis=-1))
    ny = jnp.sqrt(jnp.sum(y * y, axis=-1))
    return (dots / jnp.maximum(nx * ny, _EPS)) / temp


if __name__ == "__main__":
    key = jax.random.PRNGKey(0)
    k1, k2, k3, k4 = jax.random.split(key, 4)

    temp = 0.05
    sim = Similarity(temp)

    # 1) Typical SimCSE usage: z1.unsqueeze(1) vs z2.unsqueeze(0) -> (B, B)
    B, H = 8, 32
    z1 = jax.random.normal(k1, (B, H), dtype=jnp.float32)
    z2 = jax.random.normal(k2, (B, H), dtype=jnp.float32)
    out_pair = jax.block_until_ready(sim(z1[:, None, :], z2[None, :, :]))
    ref_pair = _reference(z1[:, None, :], z2[None, :, :], temp)
    assert out_pair.shape == (B, B)
    assert jnp.allclose(out_pair, ref_pair, atol=1e-4, rtol=1e-4)

    # 2) Same-shape row-wise case: (B, H) x (B, H) -> (B,)
    out_row = jax.block_until_ready(sim(z1, z2))
    ref_row = _reference(z1, z2, temp)
    assert out_row.shape == (B,)
    assert jnp.allclose(out_row, ref_row, atol=1e-4, rtol=1e-4)

    # 3) Exercise the multi-block (tiled) paths with small explicit tiles.
    Bt, Ct, Ht = 16, 384, 64
    a = jax.random.normal(k3, (Bt, Ht), dtype=jnp.float32)
    b = jax.random.normal(k4, (Ct, Ht), dtype=jnp.float32)
    out_t = jax.block_until_ready(_pairwise_cos_sim(a, b, temp, tm=8, tn=128))
    ref_t = _reference(a[:, None, :], b[None, :, :], temp)
    assert out_t.shape == (Bt, Ct)
    assert jnp.allclose(out_t, ref_t, atol=1e-4, rtol=1e-4)

    c = jax.random.normal(k3, (Ct, Ht), dtype=jnp.float32)
    out_r = jax.block_until_ready(_rowwise_cos_sim(b, c, temp, tn=128))
    ref_r = _reference(b, c, temp)
    assert out_r.shape == (Ct,)
    assert jnp.allclose(out_r, ref_r, atol=1e-4, rtol=1e-4)

    print("KERNEL_OK")
</pallas_src>

<mosaic_0001>
module attributes {stable_mosaic.version = 11 : i64} {
  func.func @_pairwise_cos_kernel(%arg0: i32, %arg1: i32, %arg2: memref<8x32xf32, #tpu.memory_space<vmem>>, %arg3: memref<8x32xf32, #tpu.memory_space<vmem>>, %arg4: memref<8x1xf32, #tpu.memory_space<vmem>>, %arg5: memref<1x8xf32, #tpu.memory_space<vmem>>, %arg6: memref<8x8xf32, #tpu.memory_space<vmem>>) attributes {dimension_semantics = [#tpu.dimension_semantics<parallel>, #tpu.dimension_semantics<parallel>], iteration_bounds = array<i64: 1, 1>, scalar_prefetch = 0 : i64, scratch_operands = 0 : i64, tpu.core_type = #tpu.core_type<tc>, window_params = [{transform_indices = @transform_0, window_bounds = array<i64: 8, 32>}, {transform_indices = @transform_1, window_bounds = array<i64: 8, 32>}, {transform_indices = @transform_2, window_bounds = array<i64: 8, 1>}, {transform_indices = @transform_3, window_bounds = array<i64: 1, 8>}, {transform_indices = @transform_4, window_bounds = array<i64: 8, 8>}]} {
    %c0 = arith.constant 0 : index
    %c0_0 = arith.constant 0 : index
    %0 = vector.load %arg2[%c0, %c0_0] : memref<8x32xf32, #tpu.memory_space<vmem>>, vector<8x32xf32>
    %c0_1 = arith.constant 0 : index
    %c0_2 = arith.constant 0 : index
    %1 = vector.load %arg3[%c0_1, %c0_2] : memref<8x32xf32, #tpu.memory_space<vmem>>, vector<8x32xf32>
    %cst = arith.constant dense<0.000000e+00> : vector<8x8xf32>
    %2 = tpu.matmul %0, %1, %cst {dimension_numbers = #tpu.dot_dimension_numbers<[1], [1], [0], [0], [0, 0, 1, 0], [], []>} : vector<8x32xf32>, vector<8x32xf32>, vector<8x8xf32> -> vector<8x8xf32>
    %c0_3 = arith.constant 0 : index
    %c0_4 = arith.constant 0 : index
    %3 = vector.load %arg4[%c0_3, %c0_4] : memref<8x1xf32, #tpu.memory_space<vmem>>, vector<8x1xf32>
    %c0_5 = arith.constant 0 : index
    %c0_6 = arith.constant 0 : index
    %4 = vector.load %arg5[%c0_5, %c0_6] : memref<1x8xf32, #tpu.memory_space<vmem>>, vector<1x8xf32>
    %5 = vector.broadcast %3 : vector<8x1xf32> to vector<8x8xf32>
    %6 = vector.broadcast %4 : vector<1x8xf32> to vector<8x8xf32>
    %7 = arith.mulf %5, %6 : vector<8x8xf32>
    %cst_7 = arith.constant 9.99999993E-9 : f32
    %8 = vector.broadcast %cst_7 : f32 to vector<8x8xf32>
    %9 = arith.maximumf %7, %8 : vector<8x8xf32>
    %cst_8 = arith.constant 5.000000e-02 : f32
    %10 = vector.broadcast %cst_8 : f32 to vector<8x8xf32>
    %11 = arith.mulf %9, %10 : vector<8x8xf32>
    %12 = arith.divf %2, %11 : vector<8x8xf32>
    %c0_9 = arith.constant 0 : index
    %c0_10 = arith.constant 0 : index
    %13 = vector.load %arg6[%c0_9, %c0_10] : memref<8x8xf32, #tpu.memory_space<vmem>>, vector<8x8xf32>
    tpu.vector_store %arg6[%c0_9, %c0_10], %12 {strides = array<i32>} : memref<8x8xf32, #tpu.memory_space<vmem>>, vector<8x8xf32>,
    return
  }
  func.func @transform_0(%arg0: i32, %arg1: i32) -> (i32, i32) {
    %c0_i32 = arith.constant 0 : i32
    %c0_i32_0 = arith.constant 0 : i32
    return %arg0, %c0_i32 : i32, i32
  }
  func.func @transform_1(%arg0: i32, %arg1: i32) -> (i32, i32) {
    %c0_i32 = arith.constant 0 : i32
    %c0_i32_0 = arith.constant 0 : i32
    return %arg1, %c0_i32 : i32, i32
  }
  func.func @transform_2(%arg0: i32, %arg1: i32) -> (i32, i32) {
    %c0_i32 = arith.constant 0 : i32
    %c0_i32_0 = arith.constant 0 : i32
    return %arg0, %c0_i32 : i32, i32
  }
  func.func @transform_3(%arg0: i32, %arg1: i32) -> (i32, i32) {
    %c0_i32 = arith.constant 0 : i32
    %c0_i32_0 = arith.constant 0 : i32
    return %c0_i32, %arg1 : i32, i32
  }
  func.func @transform_4(%arg0: i32, %arg1: i32) -> (i32, i32) {
    %c0_i32 = arith.constant 0 : i32
    return %arg0, %arg1 : i32, i32
  }
}

</mosaic_0001>

<llo_original>
// kernel: tpu_custom_call.1
$region0: #{tpu_custom_call.1}
  #allocation0 [shape = 'u32[]', space=smem, size = 0x4, offset = 0x4, fixed_abs, tag = 'smem constant byte address 0x4 - core index']
  #allocation1 [shape = 'u32[144,128]{1,0:T(1,128)}', space=vmem, size = 0x12000, scoped, tag = 'internal scratch']
  %s0 = inlined_call_operand.vmem [shape: f32[8,32], index: 0, kind: input, shape index: {}]
  %s1 = inlined_call_operand.hbm [shape: f32[8,32], index: 1, kind: input, shape index: {}]
  %s2 = inlined_call_operand.vmem [shape: f32[8,1], index: 2, kind: input, shape index: {}]
  %s3 = inlined_call_operand.vmem [shape: f32[1,8], index: 3, kind: input, shape index: {}]
  %s4 = inlined_call_operand.hbm [shape: f32[8,8], index: 4, kind: output, shape index: {}]
  %s5 = sld [smem:[#allocation0]]
  $region30: #{tpu_custom_call.1} parent=0
    _
  %s7 = ssub.s32 1, %s5
  %s8 = scalar_select 0, %s7, %s5
  $region1: #{tpu_custom_call.1} parent=0
    #allocation2 [shape = 'u8[4096]{0}', space=vmem, size = 0x1000, scoped, tag = 'input window, operand 1, single buffered']
    #allocation3 [shape = 's32[1]{0}', space=sflag, size = 0x4, scoped, tag = 'scoped memory for tpu_custom_call.1']
    #allocation4 [shape = 's32[1]{0}', space=sflag, size = 0x4, scoped, tag = 'scoped memory for tpu_custom_call.1']
    #allocation5 [shape = 'u8[4096]{0}', space=vmem, size = 0x1000, scoped, tag = 'output window, operand 0, single buffered']
    %9 = vsyncpa [#allocation3], 0
    %10 = vsyncpa [#allocation4], 0
    // Predicated region
    $region2: #{tpu_custom_call.1} parent=1 // pred_check
      _
    $region3: #{tpu_custom_call.1} parent=1 // pred_check_branch
      %12 = sbr.rel (0) target = $region5
    $region4: #{tpu_custom_call.1} parent=1 // pred_region
      _
    $region5: #{tpu_custom_call.1} parent=1 // pred_fallthru
      _
    // Predicated region
    $region6: #{tpu_custom_call.1} parent=1 // pred_check
      _
    $region7: #{tpu_custom_call.1} parent=1 // pred_check_branch
      %14 = sbr.rel (0) target = $region9
    $region8: #{tpu_custom_call.1} parent=1 // pred_region
      %s16 = ssub.s32 128, 128
      %17 = vsyncadd [#allocation3], %s16
      %s19 = sshll.u32 [#allocation2], 4
      %s20 = int_to_ptr.vmem [resolvable:$true] %s19
      %22 = dma.hbm_to_vmem [thread:$0]  %s1, 128, %s20, [#allocation3]
    $region9: #{tpu_custom_call.1} parent=1 // pred_fallthru
      _
    // Predicated region
    $region10: #{tpu_custom_call.1} parent=1 // pred_check
      _
    $region11: #{tpu_custom_call.1} parent=1 // pred_check_branch
      %24 = sbr.rel (0) target = $region13
    $region12: #{tpu_custom_call.1} parent=1 // pred_region
      _
    $region13: #{tpu_custom_call.1} parent=1 // pred_fallthru
      _
    // Predicated region
    $region14: #{tpu_custom_call.1} parent=1 // pred_check
      _
    $region15: #{tpu_custom_call.1} parent=1 // pred_check_branch
      %26 = sbr.rel (0) target = $region17
    $region16: #{tpu_custom_call.1} parent=1 // pred_region
      _
    $region17: #{tpu_custom_call.1} parent=1 // pred_fallthru
      _
    // Predicated region
    $region18: #{tpu_custom_call.1} parent=1 // pred_check
      _
    $region19: #{tpu_custom_call.1} parent=1 // pred_check_branch
      %28 = sbr.rel (0) target = $region21
    $region20: #{tpu_custom_call.1} parent=1 // pred_region
      %29 = dma.done [#allocation3], 128
    $region21: #{tpu_custom_call.1} parent=1 // pred_fallthru
      _
    %v30 = vld [vmem:[%s0] sm:$0xff]
    %v31 = vld [vmem:[#allocation2] sm:$0xff]
    %vm32 = vcmask 261120
    %v34 = vsel %vm32, %v30, 0
    %v37 = vsel %vm32, %v31, 0
    %39 = vmatprep.subr.mxu0 0.0
    %40 = vmatpush1.xpose.msra.mxu0 %v37
    %41 = vmatprep.subr.mxu0 0.0
    %42 = vmatpush1.xpose.msra.mxu0 0.0
    %43 = vmatprep.subr.mxu0 0.0
    %44 = vmatpush1.xpose.msra.mxu0 0.0
    %45 = vmatprep.subr.mxu0 0.0
    %46 = vmatpush1.xpose.msra.mxu0 0.0
    %47 = vmatprep.subr.mxu0 0.0
    %48 = vmatpush1.xpose.msra.mxu0 0.0
    %49 = vmatprep.subr.mxu0 0.0
    %50 = vmatpush1.xpose.msra.mxu0 0.0
    %51 = vmatprep.subr.mxu0 0.0
    %52 = vmatpush1.xpose.msra.mxu0 0.0
    %53 = vmatprep.subr.mxu0 0.0
    %54 = vmatpush1.xpose.msra.mxu0 0.0
    %55 = vmatprep.subr.mxu0 0.0
    %56 = vmatpush1.xpose.msra.mxu0 0.0
    %57 = vmatprep.subr.mxu0 0.0
    %58 = vmatpush1.xpose.msra.mxu0 0.0
    %59 = vmatprep.subr.mxu0 0.0
    %60 = vmatpush1.xpose.msra.mxu0 0.0
    %61 = vmatprep.subr.mxu0 0.0
    %62 = vmatpush1.xpose.msra.mxu0 0.0
    %63 = vmatprep.subr.mxu0 0.0
    %64 = vmatpush1.xpose.msra.mxu0 0.0
    %65 = vmatprep.subr.mxu0 0.0
    %66 = vmatpush1.xpose.msra.mxu0 0.0
    %67 = vmatprep.subr.mxu0 0.0
    %68 = vmatpush1.xpose.msra.mxu0 0.0
    %69 = vmatprep.subr.mxu0 0.0
    %70 = vmatpush1.xpose.msra.mxu0 0.0
    %71 = vmatprep.subr.mxu0 0.0
    %72 = vmatpush1.xpose.msra.mxu0 0.0
    %73 = vmatprep.subr.mxu0 0.0
    %74 = vmatpush1.xpose.msra.mxu0 0.0
    %75 = vmatprep.subr.mxu0 0.0
    %76 = vmatpush1.xpose.msra.mxu0 0.0
    %77 = vmatprep.subr.mxu0 0.0
    %78 = vmatpush1.xpose.msra.mxu0 0.0
    %79 = vmatprep.subr.mxu0 0.0
    %80 = vmatpush1.xpose.msra.mxu0 0.0
    %81 = vmatprep.subr.mxu0 0.0
    %82 = vmatpush1.xpose.msra.mxu0 0.0
    %83 = vmatprep.subr.mxu0 0.0
    %84 = vmatpush1.xpose.msra.mxu0 0.0
    %85 = vmatprep.subr.mxu0 0.0
    %86 = vmatpush1.xpose.msra.mxu0 0.0
    %87 = vmatprep.subr.mxu0 0.0
    %88 = vmatpush1.xpose.msra.mxu0 0.0
    %89 = vmatprep.subr.mxu0 0.0
    %90 = vmatpush1.xpose.msra.mxu0 0.0
    %91 = vmatprep.subr.mxu0 0.0
    %92 = vmatpush1.xpose.msra.mxu0 0.0
    %93 = vmatprep.subr.mxu0 0.0
    %94 = vmatpush1.xpose.msra.mxu0 0.0
    %95 = vmatprep.subr.mxu0 0.0
    %96 = vmatpush1.xpose.msra.mxu0 0.0
    %97 = vmatprep.subr.mxu0 0.0
    %98 = vmatpush1.xpose.msra.mxu0 0.0
    %99 = vmatprep.subr.mxu0 0.0
    %100 = vmatpush1.xpose.msra.mxu0 0.0
    %101 = vmatprep.subr.mxu0 0.0
    %102 = vmatpush1.xpose.msra.mxu0 0.0
    %103 = vmatprep.mubr.f32.mxu0 0.0
    %104 = vmatmul.mubr.f32.gmra.mrb[0].mxu0 %v34
    %v105 = vpop.f32.mrb[0].mxu0
    %v106 = vadd.f32 0.0, %v105
    %v107 = vpop.f32.mrb[0].mxu0
    %108 = vdwg.mxu0
    %v109 = vld [vmem:[%s2] sm:$0xff]
    %v110 = vld [vmem:[%s3] sm:$0x1]
    %112 = vset.pattern.permute.xlu0 0
    %113 = vperm.xlu0 %112, %v109
    %v114 = vpop.permute.xlu0 %113
    %v117 = vlaneseq
    %v118 = vshrl.u32 %v117, 7
    %v119 = vsub.s32 0, %v118
    %v120 = vrot.slane %v110, %v119
    %v122 = vmul.f32 %v114, %v120
    %v123 = vmax.f32 %v122, 1e-08
    %v124 = vmul.f32 %v123, 0.05
    %v125 = vrcp.pop %v124
    %v126 = vmul.f32 %v106, %v125
    %vm127 = vcmask 64512
    %128 = vst.msk [vmem:[#allocation5] sm:$0xff] %vm127, %v126
    // Predicated region
    $region22: #{tpu_custom_call.1} parent=1 // pred_check
      _
    $region23: #{tpu_custom_call.1} parent=1 // pred_check_branch
      %130 = sbr.rel (0) target = $region25
    $region24: #{tpu_custom_call.1} parent=1 // pred_region
      %s132 = ssub.s32 128, 128
      %133 = vsyncadd [#allocation4], %s132
      %s135 = sshll.u32 [#allocation5], 4
      %s136 = int_to_ptr.vmem [resolvable:$true] %s135
      %138 = dma.vmem_to_hbm [thread:$0]  %s136, 128, %s4, [#allocation4]
    $region25: #{tpu_custom_call.1} parent=1 // pred_fallthru
      _
    // Predicated region
    $region26: #{tpu_custom_call.1} parent=1 // pred_check
      _
    $region27: #{tpu_custom_call.1} parent=1 // pred_check_branch
      %140 = sbr.rel (0) target = $region29
    $region28: #{tpu_custom_call.1} parent=1 // pred_region
      %141 = dma.done [#allocation4], 128
    $region29: #{tpu_custom_call.1} parent=1 // pred_fallthru
      _
    %142 = vsyncpa [#allocation3], 1
    %143 = vsyncpa [#allocation4], 1

</llo_original>
